<compile_context>
chip_gen: v5e
topology: v5e:2x2
jax: 0.10.0
libtpu: 0.0.40
codegen_flags: <defaults>
</compile_context>

<pallas_src>
import jax
import jax.numpy as jnp
from jax.experimental import pallas as pl
from jax.experimental.pallas import tpu as pltpu

_SQRT1_2 = 0.7071067811865476


def _round_up(x, m):
    return ((x + m - 1) // m) * m


def _make_highway_kernel(weights_resident):
    """grid = (row_tiles [parallel], depth [arbitrary / sequential carry])."""

    def kernel(x_ref, wp_ref, bp_ref, wt_ref, bt_ref, out_ref):
        d = pl.program_id(1)

        if weights_resident:
            # Whole weight stack resident in VMEM; pick this layer's slice.
            wp = wp_ref[d]          # (Hp, Hp) bf16
            bp = bp_ref[d]          # (1, Hp)  f32
            wt = wt_ref[d]
            bt = bt_ref[d]
        else:
            wp = wp_ref[...]
            bp = bp_ref[...]
            wt = wt_ref[...]
            bt = bt_ref[...]

        # Seed the carry (held in the resident output block) exactly once.
        @pl.when(d == 0)
        def _():
            out_ref[...] = x_ref[...]

        xc = out_ref[...]                                            # (tn, Hp) f32

        # projection: x @ Wp + bp  (bf16 MXU operands, f32 accumulate / bias)
        proj = jnp.dot(xc.astype(jnp.bfloat16), wp,
                       preferred_element_type=jnp.float32) + bp

        # exact (erf) GELU, matching torch.nn.GELU(approximate='none')
        act = 0.5 * proj * (1.0 + jax.lax.erf(proj * _SQRT1_2))

        # transform gate: sigmoid(act @ Wt + bt)  (exact sigmoid)
        t = jnp.dot(act.astype(jnp.bfloat16), wt,
                    preferred_element_type=jnp.float32) + bt
        gate = jax.nn.sigmoid(t)

        # fused highway blend: gate*act + (1-gate)*x == x + gate*(act - x)
        out_ref[...] = xc + gate * (act - xc)

    return kernel


def _vmem_limit_bytes():
    try:
        cap = int(pltpu.get_tpu_info().vmem_capacity_bytes)
    except Exception:
        cap = 128 * 1024 * 1024
    # leave headroom: ~3/4 of physical, capped at 96 MiB
    return min(96 * 1024 * 1024, (cap * 3) // 4)


def _choose_tiling(n_tokens, Hp, depth, vmem_limit):
    """Pick the row tile and whether the whole weight stack stays VMEM-resident."""
    n_rows = _round_up(n_tokens, 8)

    def row_bytes(tn):
        # x block + out/carry block (f32, double-buffered) + f32 temporaries.
        return tn * Hp * 4 * (2 + 2 + 4)

    w_resident = 2 * (2 * depth * Hp * Hp * 2)     # Wp+Wt stack, bf16, 2 buffers
    w_per_layer = 2 * (2 * Hp * Hp * 2)            # one layer, bf16, 2 buffers

    budget = (vmem_limit * 17) // 20               # ~85% of the scoped limit
    weights_resident = (w_resident + row_bytes(min(512, n_rows))) <= budget
    w_bytes = w_resident if weights_resident else w_per_layer

    # Largest row tile in [256, 1024] that fits; small inputs just use all rows.
    tn = min(1024, n_rows)
    while tn > 256 and w_bytes + row_bytes(tn) > budget:
        tn //= 2
    tn = _round_up(min(tn, n_rows), 8)
    return tn, weights_resident


def prepare_highway_params(wp, bp, wt, bt, *, gate_bias=-1.0):
    """One-time weight prep (hoisted out of the per-call path).

    wp/wt: (depth, H, H) already transposed to (in, out) layout.
    bp/bt: (depth, 1, H).  Pads the hidden dim to a lane-dense multiple of 128
    and casts weights to bf16.
    """
    depth, H, _ = wp.shape
    Hp = max(128, _round_up(H, 128))
    bp = bp.reshape(depth, 1, H).astype(jnp.float32)
    bt = bt.reshape(depth, 1, H).astype(jnp.float32)
    pad = Hp - H
    if pad:
        wp_p = jnp.pad(wp.astype(jnp.bfloat16), ((0, 0), (0, pad), (0, pad)))
        wt_p = jnp.pad(wt.astype(jnp.bfloat16), ((0, 0), (0, pad), (0, pad)))
        bp_p = jnp.pad(bp, ((0, 0), (0, 0), (0, pad)))
        # Padded gate-bias lanes get the real bias so padded lanes stay benign.
        bt_p = jnp.pad(bt, ((0, 0), (0, 0), (0, pad)), constant_values=gate_bias)
    else:
        wp_p, wt_p, bp_p, bt_p = (wp.astype(jnp.bfloat16), wt.astype(jnp.bfloat16),
                                  bp, bt)
    return dict(wp=wp_p, bp=bp_p, wt=wt_p, bt=bt_p,
                hidden=H, hidden_padded=Hp, depth=depth)


def highway_forward(x, params, *, row_tile=None, weights_resident=None):
    """x: (..., H) float.  Returns the final layer output with x's shape."""
    H = params["hidden"]
    Hp = params["hidden_padded"]
    depth = params["depth"]
    orig_shape = x.shape
    N = x.size // H
    x2 = x.reshape(N, H).astype(jnp.float32)

    vmem_limit = _vmem_limit_bytes()
    tn_auto, resident_auto = _choose_tiling(N, Hp, depth, vmem_limit)
    tn = _round_up(row_tile, 8) if row_tile is not None else tn_auto
    if weights_resident is None:
        weights_resident = resident_auto

    Np = _round_up(N, tn)
    if Np != N or Hp != H:
        x2 = jnp.pad(x2, ((0, Np - N), (0, Hp - H)))

    grid = (Np // tn, depth)

    if weights_resident:
        w_spec = pl.BlockSpec((depth, Hp, Hp), lambda i, d: (0, 0, 0))
        b_spec = pl.BlockSpec((depth, 1, Hp), lambda i, d: (0, 0, 0))
    else:
        w_spec = pl.BlockSpec((None, Hp, Hp), lambda i, d: (d, 0, 0))
        b_spec = pl.BlockSpec((None, 1, Hp), lambda i, d: (d, 0, 0))

    out = pl.pallas_call(
        _make_highway_kernel(weights_resident),
        out_shape=jax.ShapeDtypeStruct((Np, Hp), jnp.float32),
        grid_spec=pltpu.PrefetchScalarGridSpec(
            num_scalar_prefetch=0,
            grid=grid,
            in_specs=[
                pl.BlockSpec((tn, Hp), lambda i, d: (i, 0)),   # x rows (pipelined)
                w_spec,                                        # Wp (bf16)
                b_spec,                                        # bp
                w_spec,                                        # Wt (bf16)
                b_spec,                                        # bt
            ],
            # Same block index across depth -> output block stays resident and
            # doubles as the carry; written back to HBM once per row tile.
            out_specs=pl.BlockSpec((tn, Hp), lambda i, d: (i, 0)),
        ),
        compiler_params=pltpu.CompilerParams(
            dimension_semantics=("parallel", "arbitrary"),
            vmem_limit_bytes=vmem_limit,
        ),
    )(x2, params["wp"], params["bp"], params["wt"], params["bt"])

    return out[:N, :H].reshape(orig_shape).astype(x.dtype)


def highway_reference(x, wp, bp, wt, bt):
    """Pure-JAX f32 reference (stack of HighwayLayer forwards)."""
    depth = wp.shape[0]
    cur = x
    for d in range(depth):
        proj = cur @ wp[d] + bp[d]
        act = 0.5 * proj * (1.0 + jax.lax.erf(proj * _SQRT1_2))
        gate = jax.nn.sigmoid(act @ wt[d] + bt[d])
        cur = gate * act + (1.0 - gate) * cur
    return cur


if __name__ == "__main__":
    B, S, H = 2, 8, 32
    depth = 3
    gate_bias = -1.0

    key = jax.random.PRNGKey(0)
    kx, kwp, kbp, kwt = jax.random.split(key, 4)

    x = jax.random.normal(kx, (B, S, H), dtype=jnp.float32)

    # Deterministic PyTorch-Linear-like init; weights stored as (in, out).
    bound = 1.0 / (H ** 0.5)
    wp = jax.random.uniform(kwp, (depth, H, H), jnp.float32, -bound, bound)
    bp = jax.random.uniform(kbp, (depth, 1, H), jnp.float32, -bound, bound)
    wt = jax.random.uniform(kwt, (depth, H, H), jnp.float32, -bound, bound)
    bt = jnp.full((depth, 1, H), gate_bias, dtype=jnp.float32)  # transform bias fill_(-1.0)

    params = prepare_highway_params(wp, bp, wt, bt, gate_bias=gate_bias)

    out = highway_forward(x, params)                              # resident weights
    out_fb = highway_forward(x, params, weights_resident=False)   # per-layer fallback
    jax.block_until_ready((out, out_fb))

    ref = highway_reference(x, wp, bp, wt, bt)
    # bf16 MXU operands (f32 accumulate / f32 carry) vs the pure-f32 reference.
    assert jnp.allclose(out, ref, atol=2e-2, rtol=2e-2), \
        float(jnp.max(jnp.abs(out - ref)))
    assert jnp.allclose(out_fb, ref, atol=2e-2, rtol=2e-2), \
        float(jnp.max(jnp.abs(out_fb - ref)))

    # Single-layer check: exactly HighwayLayer.forward.
    params1 = prepare_highway_params(wp[:1], bp[:1], wt[:1], bt[:1], gate_bias=gate_bias)
    out1 = highway_forward(x, params1)
    jax.block_until_ready(out1)
    ref1 = highway_reference(x, wp[:1], bp[:1], wt[:1], bt[:1])
    assert jnp.allclose(out1, ref1, atol=2e-2, rtol=2e-2), \
        float(jnp.max(jnp.abs(out1 - ref1)))

    print("KERNEL_OK")
</pallas_src>

<mosaic_0001>
module attributes {stable_mosaic.version = 11 : i64} {
  func.func @kernel(%arg0: i32, %arg1: i32, %arg2: memref<16x128xf32, #tpu.memory_space<vmem>>, %arg3: memref<3x128x128xbf16, #tpu.memory_space<vmem>>, %arg4: memref<3x1x128xf32, #tpu.memory_space<vmem>>, %arg5: memref<3x128x128xbf16, #tpu.memory_space<vmem>>, %arg6: memref<3x1x128xf32, #tpu.memory_space<vmem>>, %arg7: memref<16x128xf32, #tpu.memory_space<vmem>>) attributes {dimension_semantics = [#tpu.dimension_semantics<parallel>, #tpu.dimension_semantics<arbitrary>], iteration_bounds = array<i64: 1, 3>, scalar_prefetch = 0 : i64, scratch_operands = 0 : i64, tpu.core_type = #tpu.core_type<tc>, window_params = [{transform_indices = @transform_0, window_bounds = array<i64: 16, 128>}, {pipeline_mode = #tpu.pipeline_mode<synchronous>, transform_indices = @transform_1, window_bounds = array<i64: 3, 128, 128>}, {pipeline_mode = #tpu.pipeline_mode<synchronous>, transform_indices = @transform_2, window_bounds = array<i64: 3, 1, 128>}, {pipeline_mode = #tpu.pipeline_mode<synchronous>, transform_indices = @transform_3, window_bounds = array<i64: 3, 128, 128>}, {pipeline_mode = #tpu.pipeline_mode<synchronous>, transform_indices = @transform_4, window_bounds = array<i64: 3, 1, 128>}, {transform_indices = @transform_5, window_bounds = array<i64: 16, 128>}]} {
    %0 = arith.index_cast %arg1 : i32 to index
    %c0 = arith.constant 0 : index
    %c0_0 = arith.constant 0 : index
    %1 = vector.load %arg3[%0, %c0, %c0_0] : memref<3x128x128xbf16, #tpu.memory_space<vmem>>, vector<1x128x128xbf16>
    %2 = vector.shape_cast %1 : vector<1x128x128xbf16> to vector<128x128xbf16>
    %3 = arith.index_cast %arg1 : i32 to index
    %c0_1 = arith.constant 0 : index
    %c0_2 = arith.constant 0 : index
    %4 = vector.load %arg4[%3, %c0_1, %c0_2] : memref<3x1x128xf32, #tpu.memory_space<vmem>>, vector<1x1x128xf32>
    %5 = vector.shape_cast %4 : vector<1x1x128xf32> to vector<1x128xf32>
    %6 = arith.index_cast %arg1 : i32 to index
    %c0_3 = arith.constant 0 : index
    %c0_4 = arith.constant 0 : index
    %7 = vector.load %arg5[%6, %c0_3, %c0_4] : memref<3x128x128xbf16, #tpu.memory_space<vmem>>, vector<1x128x128xbf16>
    %8 = vector.shape_cast %7 : vector<1x128x128xbf16> to vector<128x128xbf16>
    %9 = arith.index_cast %arg1 : i32 to index
    %c0_5 = arith.constant 0 : index
    %c0_6 = arith.constant 0 : index
    %10 = vector.load %arg6[%9, %c0_5, %c0_6] : memref<3x1x128xf32, #tpu.memory_space<vmem>>, vector<1x1x128xf32>
    %11 = vector.shape_cast %10 : vector<1x1x128xf32> to vector<1x128xf32>
    %c0_i32 = arith.constant 0 : i32
    %12 = arith.cmpi eq, %arg1, %c0_i32 : i32
    %13 = arith.extui %12 : i1 to i32
    %c0_i32_7 = arith.constant 0 : i32
    %14 = arith.cmpi ne, %13, %c0_i32_7 : i32
    scf.if %14 {
      %c0_17 = arith.constant 0 : index
      %c0_18 = arith.constant 0 : index
      %41 = vector.load %arg2[%c0_17, %c0_18] : memref<16x128xf32, #tpu.memory_space<vmem>>, vector<16x128xf32>
      %c0_19 = arith.constant 0 : index
      %c0_20 = arith.constant 0 : index
      %42 = vector.load %arg7[%c0_19, %c0_20] : memref<16x128xf32, #tpu.memory_space<vmem>>, vector<16x128xf32>
      tpu.vector_store %arg7[%c0_19, %c0_20], %41 {strides = array<i32>} : memref<16x128xf32, #tpu.memory_space<vmem>>, vector<16x128xf32>,
    } else {
    }
    %c0_8 = arith.constant 0 : index
    %c0_9 = arith.constant 0 : index
    %15 = vector.load %arg7[%c0_8, %c0_9] : memref<16x128xf32, #tpu.memory_space<vmem>>, vector<16x128xf32>
    %16 = arith.truncf %15 : vector<16x128xf32> to vector<16x128xbf16>
    %cst = arith.constant dense<0.000000e+00> : vector<16x128xf32>
    %17 = tpu.matmul %16, %2, %cst {dimension_numbers = #tpu.dot_dimension_numbers<[1], [0], [0], [1], [0, 0, 1, 1], [], []>} : vector<16x128xbf16>, vector<128x128xbf16>, vector<16x128xf32> -> vector<16x128xf32>
    %18 = vector.broadcast %5 : vector<1x128xf32> to vector<16x128xf32>
    %19 = arith.addf %17, %18 : vector<16x128xf32>
    %cst_10 = arith.constant 5.000000e-01 : f32
    %20 = vector.broadcast %cst_10 : f32 to vector<16x128xf32>
    %21 = arith.mulf %20, %19 : vector<16x128xf32>
    %cst_11 = arith.constant 0.707106769 : f32
    %22 = vector.broadcast %cst_11 : f32 to vector<16x128xf32>
    %23 = arith.mulf %19, %22 : vector<16x128xf32>
    %24 = math.erf %23 : vector<16x128xf32>
    %cst_12 = arith.constant 1.000000e+00 : f32
    %25 = vector.broadcast %cst_12 : f32 to vector<16x128xf32>
    %26 = arith.addf %25, %24 : vector<16x128xf32>
    %27 = arith.mulf %21, %26 : vector<16x128xf32>
    %28 = arith.truncf %27 : vector<16x128xf32> to vector<16x128xbf16>
    %cst_13 = arith.constant dense<0.000000e+00> : vector<16x128xf32>
    %29 = tpu.matmul %28, %8, %cst_13 {dimension_numbers = #tpu.dot_dimension_numbers<[1], [0], [0], [1], [0, 0, 1, 1], [], []>} : vector<16x128xbf16>, vector<128x128xbf16>, vector<16x128xf32> -> vector<16x128xf32>
    %30 = vector.broadcast %11 : vector<1x128xf32> to vector<16x128xf32>
    %31 = arith.addf %29, %30 : vector<16x128xf32>
    %32 = arith.negf %31 : vector<16x128xf32>
    %33 = math.exp %32 : vector<16x128xf32>
    %cst_14 = arith.constant 1.000000e+00 : f32
    %34 = vector.broadcast %cst_14 : f32 to vector<16x128xf32>
    %35 = arith.addf %34, %33 : vector<16x128xf32>
    %36 = arith.divf %34, %35 : vector<16x128xf32>
    %37 = arith.subf %27, %15 : vector<16x128xf32>
    %38 = arith.mulf %36, %37 : vector<16x128xf32>
    %39 = arith.addf %15, %38 : vector<16x128xf32>
    %c0_15 = arith.constant 0 : index
    %c0_16 = arith.constant 0 : index
    %40 = vector.load %arg7[%c0_15, %c0_16] : memref<16x128xf32, #tpu.memory_space<vmem>>, vector<16x128xf32>
    tpu.vector_store %arg7[%c0_15, %c0_16], %39 {strides = array<i32>} : memref<16x128xf32, #tpu.memory_space<vmem>>, vector<16x128xf32>,
    return
  }
  func.func @transform_0(%arg0: i32, %arg1: i32) -> (i32, i32) {
    %c0_i32 = arith.constant 0 : i32
    %c0_i32_0 = arith.constant 0 : i32
    return %arg0, %c0_i32 : i32, i32
  }
  func.func @transform_1(%arg0: i32, %arg1: i32) -> (i32, i32, i32) {
    %c0_i32 = arith.constant 0 : i32
    %c0_i32_0 = arith.constant 0 : i32
    %c0_i32_1 = arith.constant 0 : i32
    %c0_i32_2 = arith.constant 0 : i32
    return %c0_i32, %c0_i32_0, %c0_i32_1 : i32, i32, i32
  }
  func.func @transform_2(%arg0: i32, %arg1: i32) -> (i32, i32, i32) {
    %c0_i32 = arith.constant 0 : i32
    %c0_i32_0 = arith.constant 0 : i32
    %c0_i32_1 = arith.constant 0 : i32
    %c0_i32_2 = arith.constant 0 : i32
    return %c0_i32, %c0_i32_0, %c0_i32_1 : i32, i32, i32
  }
  func.func @transform_3(%arg0: i32, %arg1: i32) -> (i32, i32, i32) {
    %c0_i32 = arith.constant 0 : i32
    %c0_i32_0 = arith.constant 0 : i32
    %c0_i32_1 = arith.constant 0 : i32
    %c0_i32_2 = arith.constant 0 : i32
    return %c0_i32, %c0_i32_0, %c0_i32_1 : i32, i32, i32
  }
  func.func @transform_4(%arg0: i32, %arg1: i32) -> (i32, i32, i32) {
    %c0_i32 = arith.constant 0 : i32
    %c0_i32_0 = arith.constant 0 : i32
    %c0_i32_1 = arith.constant 0 : i32
    %c0_i32_2 = arith.constant 0 : i32
    return %c0_i32, %c0_i32_0, %c0_i32_1 : i32, i32, i32
  }
  func.func @transform_5(%arg0: i32, %arg1: i32) -> (i32, i32) {
    %c0_i32 = arith.constant 0 : i32
    %c0_i32_0 = arith.constant 0 : i32
    return %arg0, %c0_i32 : i32, i32
  }
}

</mosaic_0001>

<llo_original>
// kernel: tpu_custom_call.1
$region0: #{tpu_custom_call.1}
  #allocation0 [shape = 'u32[]', space=smem, size = 0x4, offset = 0x4, fixed_abs, tag = 'smem constant byte address 0x4 - core index']
  #allocation1 [shape = 'u32[72,128]{1,0:T(1,128)}', space=vmem, size = 0x9000, scoped, tag = 'internal scratch']
  %s0 = inlined_call_operand.hbm [shape: f32[16,128], index: 0, kind: input, shape index: {}]
  %s1 = inlined_call_operand.hbm [shape: bf16[3,128,128], index: 1, kind: input, shape index: {}]
  %s2 = inlined_call_operand.hbm [shape: f32[3,1,128], index: 2, kind: input, shape index: {}]
  %s3 = inlined_call_operand.hbm [shape: bf16[3,128,128], index: 3, kind: input, shape index: {}]
  %s4 = inlined_call_operand.vmem [shape: f32[3,1,128], index: 4, kind: input, shape index: {}]
  %s5 = inlined_call_operand.hbm [shape: f32[16,128], index: 5, kind: output, shape index: {}]
  %s6 = sld [smem:[#allocation0]]
  $region73: #{tpu_custom_call.1} parent=0
    _
  %s8 = ssub.s32 1, %s6
  %s9 = scalar_select 0, %s8, %s6
  $region1: #{tpu_custom_call.1} parent=0
    #allocation2 [shape = 'u8[8192]{0}', space=vmem, size = 0x2000, scoped, tag = 'input window, operand 0, single buffered']
    #allocation3 [shape = 's32[2]{0}', space=sflag, size = 0x8, scoped, tag = 'scoped memory for tpu_custom_call.1']
    #allocation4 [shape = 's32[2]{0}', space=sflag, size = 0x8, scoped, tag = 'scoped memory for tpu_custom_call.1']
    #allocation5 [shape = 'u8[98304]{0}', space=vmem, size = 0x18000, scoped, tag = 'input window, operand 1, single buffered']
    #allocation6 [shape = 's32[1]{0}', space=sflag, size = 0x4, scoped, tag = 'scoped memory for tpu_custom_call.1']
    #allocation7 [shape = 'u8[1536]{0}', space=vmem, size = 0x800, scoped, tag = 'input window, operand 2, single buffered']
    #allocation8 [shape = 'u8[98304]{0}', space=vmem, size = 0x18000, scoped, tag = 'input window, operand 3, single buffered']
    #allocation9 [shape = 's32[1]{0}', space=sflag, size = 0x4, scoped, tag = 'scoped memory for tpu_custom_call.1']
    #allocation10 [shape = 'u8[8192]{0}', space=vmem, size = 0x2000, scoped, tag = 'output window, operand 0, single buffered']
    %10 = vsyncpa [#allocation3], 0
    %11 = vsyncpa [#allocation6], 0
    %12 = vsyncpa [#allocation9], 0
    %13 = vsyncpa [#allocation4], 0
    loop: start=0, step=1, limit=5
    $region2: #{tpu_custom_call.1} parent=1 // loop_pre_header
      _
    $region3: #{tpu_custom_call.1} parent=1 // loop_header
      %s15 = sphi 0, %s19
      %p16 = scmp.ge.s32.totalorder %s15, 5
      %s22 = sphi 0, %s34
      %s23 = sphi 0, %s30
      %s24 = sphi 0, %s22
      %s25 = sphi 0, %s23
      %s26 = sphi 0, %s24
      %s27 = sphi 0, %s25
      %s37 = sphi 0, %s39
      %s40 = sphi 0, %s37
      %s41 = sphi 0, %s40
      %s57 = sphi 0, %s41
      %s61 = sphi 0, %s61
      %s63 = sphi 0, %s61
      %s64 = sphi 0, %s63
      %s78 = sphi 0, %s64
      %s82 = sphi 0, %s82
      %s84 = sphi 0, %s82
      %s85 = sphi 0, %s84
      %s99 = sphi 0, %s85
      %s103 = sphi 0, %s103
      %s105 = sphi 0, %s103
      %s106 = sphi 0, %s105
      %s120 = sphi 0, %s106
      %s124 = sphi 0, %s124
      %s126 = sphi 0, %s124
      %s127 = sphi 0, %s126
      %s141 = sphi 0, %s127
      %s147 = sphi 0, %s149
      %s150 = sphi 0, %s147
      %s151 = sphi 0, %s150
      %s167 = sphi 0, %s151
    $region4: #{tpu_custom_call.1} parent=1 // loop_header_branch
      %18 = sbr.rel (%p16) target = $region8
    $region5: #{tpu_custom_call.1} parent=1 // loop_body
      %s20 = ssub.s32 %s15, 1
      %s21 = ssub.s32 %s15, 2
      %s28 = sadd.s32 1, %s23
      %p29 = scmp.ge.s32.totalorder %s28, 3
      %s30 = scalar_select %p29, 0, %s28
      %s31 = sadd.s32 1, %s22
      %s32 = scalar_select %p29, %s31, %s22
      %p33 = scmp.ge.s32.totalorder %s32, 1
      %s34 = scalar_select %p33, 0, %s32
      %s35 = ssub.s32 %s22, %s34
      %p36 = scmp.eq.s32.totalorder %s35, 0
      %s38 = sadd.s32 %s37, 1
      %s39 = scalar_select %p36, %s37, %s38
      %p42 = pneg %p36
      %p43 = scmp.eq.s32.totalorder %s15, 2
      %p44 = por %p42, %p43
      %p45 = scmp.ne.s32.totalorder %s37, %s40
      %p46 = scmp.eq.s32.totalorder %s15, 0
      %p47 = por %p45, %p46
      %p48 = scmp.ne.s32.totalorder %s37, %s40
      %p49 = scmp.eq.s32.totalorder %s20, 2
      %p50 = por %p48, %p49
      %p51 = scmp.ne.s32.totalorder %s40, %s41
      %p52 = scmp.eq.s32.totalorder %s20, 0
      %p53 = por %p51, %p52
      %p54 = scmp.ne.s32.totalorder %s40, %s41
      %p55 = scmp.eq.s32.totalorder %s21, 2
      %p56 = por %p54, %p55
      %p58 = scmp.ne.s32.totalorder %s41, %s57
      %p59 = scmp.eq.s32.totalorder %s21, 0
      %p60 = por %p58, %p59
      %s62 = sadd.s32 %s61, 1
      %p65 = scmp.eq.s32.totalorder %s15, 2
      %p66 = scmp.ne.s32.totalorder %s61, %s63
      %p67 = scmp.eq.s32.totalorder %s15, 0
      %p68 = por %p66, %p67
      %p69 = scmp.ne.s32.totalorder %s61, %s63
      %p70 = scmp.eq.s32.totalorder %s20, 2
      %p71 = por %p69, %p70
      %p72 = scmp.ne.s32.totalorder %s63, %s64
      %p73 = scmp.eq.s32.totalorder %s20, 0
      %p74 = por %p72, %p73
      %p75 = scmp.ne.s32.totalorder %s63, %s64
      %p76 = scmp.eq.s32.totalorder %s21, 2
      %p77 = por %p75, %p76
      %p79 = scmp.ne.s32.totalorder %s64, %s78
      %p80 = scmp.eq.s32.totalorder %s21, 0
      %p81 = por %p79, %p80
      %s83 = sadd.s32 %s82, 1
      %p86 = scmp.eq.s32.totalorder %s15, 2
      %p87 = scmp.ne.s32.totalorder %s82, %s84
      %p88 = scmp.eq.s32.totalorder %s15, 0
      %p89 = por %p87, %p88
      %p90 = scmp.ne.s32.totalorder %s82, %s84
      %p91 = scmp.eq.s32.totalorder %s20, 2
      %p92 = por %p90, %p91
      %p93 = scmp.ne.s32.totalorder %s84, %s85
      %p94 = scmp.eq.s32.totalorder %s20, 0
      %p95 = por %p93, %p94
      %p96 = scmp.ne.s32.totalorder %s84, %s85
      %p97 = scmp.eq.s32.totalorder %s21, 2
      %p98 = por %p96, %p97
      %p100 = scmp.ne.s32.totalorder %s85, %s99
      %p101 = scmp.eq.s32.totalorder %s21, 0
      %p102 = por %p100, %p101
      %s104 = sadd.s32 %s103, 1
      %p107 = scmp.eq.s32.totalorder %s15, 2
      %p108 = scmp.ne.s32.totalorder %s103, %s105
      %p109 = scmp.eq.s32.totalorder %s15, 0
      %p110 = por %p108, %p109
      %p111 = scmp.ne.s32.totalorder %s103, %s105
      %p112 = scmp.eq.s32.totalorder %s20, 2
      %p113 = por %p111, %p112
      %p114 = scmp.ne.s32.totalorder %s105, %s106
      %p115 = scmp.eq.s32.totalorder %s20, 0
      %p116 = por %p114, %p115
      %p117 = scmp.ne.s32.totalorder %s105, %s106
      %p118 = scmp.eq.s32.totalorder %s21, 2
      %p119 = por %p117, %p118
      %p121 = scmp.ne.s32.totalorder %s106, %s120
      %p122 = scmp.eq.s32.totalorder %s21, 0
      %p123 = por %p121, %p122
      %s125 = sadd.s32 %s124, 1
      %p128 = scmp.eq.s32.totalorder %s15, 2
      %p129 = scmp.ne.s32.totalorder %s124, %s126
      %p130 = scmp.eq.s32.totalorder %s15, 0
      %p131 = por %p129, %p130
      %p132 = scmp.ne.s32.totalorder %s124, %s126
      %p133 = scmp.eq.s32.totalorder %s20, 2
      %p134 = por %p132, %p133
      %p135 = scmp.ne.s32.totalorder %s126, %s127
      %p136 = scmp.eq.s32.totalorder %s20, 0
      %p137 = por %p135, %p136
      %p138 = scmp.ne.s32.totalorder %s126, %s127
      %p139 = scmp.eq.s32.totalorder %s21, 2
      %p140 = por %p138, %p139
      %p142 = scmp.ne.s32.totalorder %s127, %s141
      %p143 = scmp.eq.s32.totalorder %s21, 0
      %p144 = por %p142, %p143
      %s145 = ssub.s32 %s22, %s34
      %p146 = scmp.eq.s32.totalorder %s145, 0
      %s148 = sadd.s32 %s147, 1
      %s149 = scalar_select %p146, %s147, %s148
      %p152 = pneg %p146
      %p153 = scmp.eq.s32.totalorder %s15, 2
      %p154 = por %p152, %p153
      %p155 = scmp.ne.s32.totalorder %s147, %s150
      %p156 = scmp.eq.s32.totalorder %s15, 0
      %p157 = por %p155, %p156
      %p158 = scmp.ne.s32.totalorder %s147, %s150
      %p159 = scmp.eq.s32.totalorder %s20, 2
      %p160 = por %p158, %p159
      %p161 = scmp.ne.s32.totalorder %s150, %s151
      %p162 = scmp.eq.s32.totalorder %s20, 0
      %p163 = por %p161, %p162
      %p164 = scmp.ne.s32.totalorder %s150, %s151
      %p165 = scmp.eq.s32.totalorder %s21, 2
      %p166 = por %p164, %p165
      %p168 = scmp.ne.s32.totalorder %s151, %s167
      %p169 = scmp.eq.s32.totalorder %s21, 0
      %p170 = por %p168, %p169
      %p171 = scmp.le.s32.totalorder 1, %s15
      %p172 = scmp.lt.s32.totalorder %s15, 4
      %p173 = pnand %p171, %p172
      %p174 = pneg %p173
      // Predicated region
      $region9: #{tpu_custom_call.1} parent=5 // pred_check
        _
      $region10: #{tpu_custom_call.1} parent=5 // pred_check_branch
        %176 = sbr.rel (%p173) target = $region12
      $region11: #{tpu_custom_call.1} parent=5 // pred_region
        %s177 = ssub.s32 %s15, 1
        // Predicated region
        $region13: #{tpu_custom_call.1} parent=11 // pred_check
          %p178 = pneg %p53
        $region14: #{tpu_custom_call.1} parent=11 // pred_check_branch
          %180 = sbr.rel (%p178) target = $region16
        $region15: #{tpu_custom_call.1} parent=11 // pred_region
          %s181 = smul.u32 2, %s24
          %183 = vsyncadd [#allocation3], 0
          %s184 = smul.addr %s181, 8
          %s185 = scalar_lea.hbm %s0, %s184
          %s186 = sshll.u32 %s185, 4
          %s187 = int_to_ptr.hbm [resolvable:$true] %s186
          %s188 = sshll.u32 [#allocation2], 4
          %s189 = int_to_ptr.vmem [resolvable:$true] %s188
          %194 = dma.hbm_to_vmem [thread:$0]  %s187, 256, %s189, [#allocation3], 128, 128, 8
        $region16: #{tpu_custom_call.1} parent=11 // pred_fallthru
          _
        // Predicated region
        $region17: #{tpu_custom_call.1} parent=11 // pred_check
          %p195 = pneg %p74
        $region18: #{tpu_custom_call.1} parent=11 // pred_check_branch
          %197 = sbr.rel (%p195) target = $region20
        $region19: #{tpu_custom_call.1} parent=11 // pred_region
          %199 = vsyncadd [#allocation6], 0
          %s200 = sshll.u32 %s1, 4
          %s201 = int_to_ptr.hbm [resolvable:$true] %s200
          %s202 = sshll.u32 [#allocation5], 4
          %s203 = int_to_ptr.vmem [resolvable:$true] %s202
          %208 = dma.hbm_to_vmem [thread:$0]  %s201, 3072, %s203, [#allocation6], 64, 64, 4
        $region20: #{tpu_custom_call.1} parent=11 // pred_fallthru
          _
        // Predicated region
        $region21: #{tpu_custom_call.1} parent=11 // pred_check
          %p209 = pneg %p95
        $region22: #{tpu_custom_call.1} parent=11 // pred_check_branch
          %211 = sbr.rel (%p209) target = $region24
        $region23: #{tpu_custom_call.1} parent=11 // pred_region
          %213 = vsyncadd [#allocation6], 0
          %s214 = sshll.u32 %s2, 4
          %s215 = int_to_ptr.hbm [resolvable:$true] %s214
          %s216 = sshll.u32 [#allocation7], 4
          %s217 = int_to_ptr.vmem [resolvable:$true] %s216
          %222 = dma.hbm_to_vmem [thread:$0]  %s215, 48, %s217, [#allocation6], 16, 16, 1
        $region24: #{tpu_custom_call.1} parent=11 // pred_fallthru
          _
        // Predicated region
        $region25: #{tpu_custom_call.1} parent=11 // pred_check
          %p223 = pneg %p116
        $region26: #{tpu_custom_call.1} parent=11 // pred_check_branch
          %225 = sbr.rel (%p223) target = $region28
        $region27: #{tpu_custom_call.1} parent=11 // pred_region
          %227 = vsyncadd [#allocation9], 0
          %s228 = sshll.u32 %s3, 4
          %s229 = int_to_ptr.hbm [resolvable:$true] %s228
          %s230 = sshll.u32 [#allocation8], 4
          %s231 = int_to_ptr.vmem [resolvable:$true] %s230
          %236 = dma.hbm_to_vmem [thread:$0]  %s229, 3072, %s231, [#allocation9], 64, 64, 4
        $region28: #{tpu_custom_call.1} parent=11 // pred_fallthru
          _
        // Predicated region
        $region29: #{tpu_custom_call.1} parent=11 // pred_check
          %p237 = pneg %p137
        $region30: #{tpu_custom_call.1} parent=11 // pred_check_branch
          %239 = sbr.rel (%p237) target = $region32
        $region31: #{tpu_custom_call.1} parent=11 // pred_region
          _
        $region32: #{tpu_custom_call.1} parent=11 // pred_fallthru
          _
      $region12: #{tpu_custom_call.1} parent=5 // pred_fallthru
        _
      %p240 = scmp.lt.s32.totalorder %s15, 3
      // Predicated region
      $region33: #{tpu_custom_call.1} parent=5 // pred_check
        %p241 = pneg %p240
      $region34: #{tpu_custom_call.1} parent=5 // pred_check_branch
        %243 = sbr.rel (%p241) target = $region36
      $region35: #{tpu_custom_call.1} parent=5 // pred_region
        _
      $region36: #{tpu_custom_call.1} parent=5 // pred_fallthru
        _
      %p244 = scmp.le.s32.totalorder 1, %s15
      %p245 = scmp.lt.s32.totalorder %s15, 4
      %p246 = pnand %p244, %p245
      %p247 = pneg %p246
      // Predicated region
      $region37: #{tpu_custom_call.1} parent=5 // pred_check
        _
      $region38: #{tpu_custom_call.1} parent=5 // pred_check_branch
        %249 = sbr.rel (%p246) target = $region40
      $region39: #{tpu_custom_call.1} parent=5 // pred_region
        %s250 = ssub.s32 %s15, 1
        // Predicated region
        $region41: #{tpu_custom_call.1} parent=39 // pred_check
          %p251 = pneg %p53
        $region42: #{tpu_custom_call.1} parent=39 // pred_check_branch
          %253 = sbr.rel (%p251) target = $region44
        $region43: #{tpu_custom_call.1} parent=39 // pred_region
          %255 = dma.done [#allocation3], 256
        $region44: #{tpu_custom_call.1} parent=39 // pred_fallthru
          _
        // Predicated region
        $region45: #{tpu_custom_call.1} parent=39 // pred_check
          %p256 = pneg %p74
        $region46: #{tpu_custom_call.1} parent=39 // pred_check_branch
          %258 = sbr.rel (%p256) target = $region48
        $region47: #{tpu_custom_call.1} parent=39 // pred_region
          %260 = dma.done [#allocation6], 3072
        $region48: #{tpu_custom_call.1} parent=39 // pred_fallthru
          _
        // Predicated region
        $region49: #{tpu_custom_call.1} parent=39 // pred_check
          %p261 = pneg %p95
        $region50: #{tpu_custom_call.1} parent=39 // pred_check_branch
          %263 = sbr.rel (%p261) target = $region52
        $region51: #{tpu_custom_call.1} parent=39 // pred_region
          %265 = dma.done [#allocation6], 48
        $region52: #{tpu_custom_call.1} parent=39 // pred_fallthru
          _
        // Predicated region
        $region53: #{tpu_custom_call.1} parent=39 // pred_check
          %p266 = pneg %p116
        $region54: #{tpu_custom_call.1} parent=39 // pred_check_branch
          %268 = sbr.rel (%p266) target = $region56
        $region55: #{tpu_custom_call.1} parent=39 // pred_region
          %270 = dma.done [#allocation9], 3072
        $region56: #{tpu_custom_call.1} parent=39 // pred_fallthru
          _
        %p271 = pneg %p53
        %p272 = pneg %p50
        %p273 = pneg %p74
        %p274 = pneg %p71
        %p275 = pneg %p95
        %p276 = pneg %p92
        %p277 = pneg %p116
        %p278 = pneg %p113
        %p279 = pneg %p137
        %p280 = pneg %p134
        %p281 = pneg %p163
        %p282 = pneg %p160
        %s283 = smul.u32 2, %s24
        %s284 = smul.u32 2, %s24
        %s285 = smul.u32 %s25, 16
        %s286 = smul.addr %s285, 4
        %s287 = scalar_lea.vmem [#allocation5], %s286
        %v288 = vld [vmem:[%s287] sm:$0xf]
        %v289 = vld [vmem:[%s287 + $0x4] sm:$0xf]
        %v290 = vld [vmem:[%s287 + $0x8] sm:$0xf]
        %v291 = vld [vmem:[%s287 + $0xc] sm:$0xf]
        %v292 = vld [vmem:[%s287 + $0x10] sm:$0xf]
        %v293 = vld [vmem:[%s287 + $0x14] sm:$0xf]
        %v294 = vld [vmem:[%s287 + $0x18] sm:$0xf]
        %v295 = vld [vmem:[%s287 + $0x1c] sm:$0xf]
        %v296 = vld [vmem:[%s287 + $0x20] sm:$0xf]
        %v297 = vld [vmem:[%s287 + $0x24] sm:$0xf]
        %v298 = vld [vmem:[%s287 + $0x28] sm:$0xf]
        %v299 = vld [vmem:[%s287 + $0x2c] sm:$0xf]
        %v300 = vld [vmem:[%s287 + $0x30] sm:$0xf]
        %v301 = vld [vmem:[%s287 + $0x34] sm:$0xf]
        %v302 = vld [vmem:[%s287 + $0x38] sm:$0xf]
        %v303 = vld [vmem:[%s287 + $0x3c] sm:$0xf]
        %s304 = scalar_lea.vmem [#allocation7], %s25
        %v305 = vld [vmem:[%s304] sm:$0x1]
        %s306 = smul.addr %s285, 4
        %s307 = scalar_lea.vmem [#allocation8], %s306
        %v308 = vld [vmem:[%s307] sm:$0xf]
        %v309 = vld [vmem:[%s307 + $0x4] sm:$0xf]
        %v310 = vld [vmem:[%s307 + $0x8] sm:$0xf]
        %v311 = vld [vmem:[%s307 + $0xc] sm:$0xf]
        %v312 = vld [vmem:[%s307 + $0x10] sm:$0xf]
        %v313 = vld [vmem:[%s307 + $0x14] sm:$0xf]
        %v314 = vld [vmem:[%s307 + $0x18] sm:$0xf]
        %v315 = vld [vmem:[%s307 + $0x1c] sm:$0xf]
        %v316 = vld [vmem:[%s307 + $0x20] sm:$0xf]
        %v317 = vld [vmem:[%s307 + $0x24] sm:$0xf]
        %v318 = vld [vmem:[%s307 + $0x28] sm:$0xf]
        %v319 = vld [vmem:[%s307 + $0x2c] sm:$0xf]
        %v320 = vld [vmem:[%s307 + $0x30] sm:$0xf]
        %v321 = vld [vmem:[%s307 + $0x34] sm:$0xf]
        %v322 = vld [vmem:[%s307 + $0x38] sm:$0xf]
        %v323 = vld [vmem:[%s307 + $0x3c] sm:$0xf]
        %s324 = scalar_lea.vmem %s4, %s25
        %v325 = vld [vmem:[%s324] sm:$0x1]
        %p326 = scmp.eq.s32.totalorder %s25, 0
        // Predicated region
        $region57: #{tpu_custom_call.1} parent=39 // pred_check
          %p327 = pneg %p326
        $region58: #{tpu_custom_call.1} parent=39 // pred_check_branch
          %329 = sbr.rel (%p327) target = $region60
        $region59: #{tpu_custom_call.1} parent=39 // pred_region
          %v330 = vld [vmem:[#allocation2] sm:$0xff]
          %v331 = vld [vmem:[#allocation2 + $0x8] sm:$0xff]
          %332 = vst [vmem:[#allocation10] sm:$0xff] %v330
          %333 = vst [vmem:[#allocation10 + $0x8] sm:$0xff] %v331
        $region60: #{tpu_custom_call.1} parent=39 // pred_fallthru
          _
        %v334 = vld [vmem:[#allocation10] sm:$0xff]
        %v335 = vld [vmem:[#allocation10 + $0x8] sm:$0xff]
        %v336 = vpack.c.bf16 %v335, %v334
        %v338 = vperm.slane %v305, 0
        %v356 = vunpack.c.l.b16 %v288
        %v357 = vunpack.c.l.b16 %v289
        %v358 = vunpack.c.l.b16 %v290
        %v359 = vunpack.c.l.b16 %v291
        %v360 = vunpack.c.l.b16 %v292
        %v361 = vunpack.c.l.b16 %v293
        %v362 = vunpack.c.l.b16 %v294
        %v363 = vunpack.c.l.b16 %v295
        %v364 = vunpack.c.l.b16 %v296
        %v365 = vunpack.c.l.b16 %v297
        %v366 = vunpack.c.l.b16 %v298
        %v367 = vunpack.c.l.b16 %v299
        %v368 = vunpack.c.l.b16 %v300
        %v369 = vunpack.c.l.b16 %v301
        %v370 = vunpack.c.l.b16 %v302
        %v371 = vunpack.c.l.b16 %v303
        %v372 = vpack.c.b16 %v357, %v356
        %v373 = vpack.c.b16 %v359, %v358
        %v374 = vpack.c.b16 %v361, %v360
        %v375 = vpack.c.b16 %v363, %v362
        %v376 = vpack.c.b16 %v365, %v364
        %v377 = vpack.c.b16 %v367, %v366
        %v378 = vpack.c.b16 %v369, %v368
        %v379 = vpack.c.b16 %v371, %v370
        %388 = vmatpush.bf16.msra.mxu0 %v379
        %389 = vmatpush.bf16.msra.mxu0 %v378
        %390 = vmatpush.bf16.msra.mxu0 %v377
        %391 = vmatpush.bf16.msra.mxu0 %v376
        %392 = vmatpush.bf16.msra.mxu0 %v375
        %393 = vmatpush.bf16.msra.mxu0 %v374
        %394 = vmatpush.bf16.msra.mxu0 %v373
        %395 = vmatpush.bf16.msra.mxu0 %v372
        %396 = vmatmul.bf16.gmra.mxu0 %v336
        %v397 = vpop.f32.mrf.mxu0
        %v398 = vadd.f32 %v338, %v397
        %v399 = vpop.f32.mrf.mxu0
        %v400 = vadd.f32 %v338, %v399
        %401 = vdwg.mxu0
        %v402 = vmul.f32 %v398, 0.5
        %v403 = vmul.f32 %v400, 0.5
        %v404 = vmul.f32 %v398, 0.70710677
        %v405 = vmul.f32 %v400, 0.70710677
        %v406 = vmul.f32 %v404, %v404
        %v407 = vmin.f32 16.0, %v406
        %v408 = vmul.f32 %v407, 2.1237322e-06
        %v409 = vadd.f32 %v408, 0.00028619796
        %v410 = vmul.f32 %v407, %v409
        %v411 = vadd.f32 %v410, 0.0036580483
        %v412 = vmul.f32 %v407, %v411
        %v413 = vadd.f32 %v412, 0.05243302
        %v414 = vmul.f32 %v407, %v413
        %v415 = vadd.f32 %v414, 0.18741608
        %v416 = vmul.f32 %v407, %v415
        %v417 = vadd.f32 %v416, 1.1283791
        %v418 = vmul.f32 %v404, %v417
        %v419 = vmul.f32 %v407, 3.8918573e-05
        %v420 = vadd.f32 %v419, 0.001143296
        %v421 = vmul.f32 %v407, %v420
        %v422 = vadd.f32 %v421, 0.014752088
        %v423 = vmul.f32 %v407, %v422
        %v424 = vadd.f32 %v423, 0.112945676
        %v425 = vmul.f32 %v407, %v424
        %v426 = vadd.f32 %v425, 0.4994258
        %v427 = vmul.f32 %v407, %v426
        %v428 = vadd.f32 %v427, 1.0
        %v429 = vrcp.pop %v428
        %v430 = vmul.f32 %v428, %v429
        %v431 = vsub.f32 1.0, %v430
        %v432 = vmul.f32 %v429, %v431
        %v433 = vadd.f32 %v429, %v432
        %vm434 = vweird.f32 %v428
        %vm435 = vweird.f32 %v429
        %vm436 = vmor %vm434, %vm435
        %v437 = vsel %vm436, %v429, %v433
        %v438 = vand.u32 2147483647, %v428
        %vm439 = vcmp.eq.f32.partialorder %v438, 8.507059e+37
        %v440 = vand.u32 %v428, 2147483648
        %v441 = vor.u32 1.1754944e-38, %v440
        %v442 = vsel %vm439, %v441, %v437
        %v443 = vmul.f32 %v418, %v442
        %v444 = vmin.f32 %v443, 1.0
        %v445 = vmax.f32 %v444, -1.0
        %v446 = vmul.f32 %v405, %v405
        %v447 = vmin.f32 16.0, %v446
        %v448 = vmul.f32 %v447, 2.1237322e-06
        %v449 = vadd.f32 %v448, 0.00028619796
        %v450 = vmul.f32 %v447, %v449
        %v451 = vadd.f32 %v450, 0.0036580483
        %v452 = vmul.f32 %v447, %v451
        %v453 = vadd.f32 %v452, 0.05243302
        %v454 = vmul.f32 %v447, %v453
        %v455 = vadd.f32 %v454, 0.18741608
        %v456 = vmul.f32 %v447, %v455
        %v457 = vadd.f32 %v456, 1.1283791
        %v458 = vmul.f32 %v405, %v457
        %v459 = vmul.f32 %v447, 3.8918573e-05
        %v460 = vadd.f32 %v459, 0.001143296
        %v461 = vmul.f32 %v447, %v460
        %v462 = vadd.f32 %v461, 0.014752088
        %v463 = vmul.f32 %v447, %v462
        %v464 = vadd.f32 %v463, 0.112945676
        %v465 = vmul.f32 %v447, %v464
        %v466 = vadd.f32 %v465, 0.4994258
        %v467 = vmul.f32 %v447, %v466
        %v468 = vadd.f32 %v467, 1.0
        %v469 = vrcp.pop %v468
        %v470 = vmul.f32 %v468, %v469
        %v471 = vsub.f32 1.0, %v470
        %v472 = vmul.f32 %v469, %v471
        %v473 = vadd.f32 %v469, %v472
        %vm474 = vweird.f32 %v468
        %vm475 = vweird.f32 %v469
        %vm476 = vmor %vm474, %vm475
        %v477 = vsel %vm476, %v469, %v473
        %v478 = vand.u32 2147483647, %v468
        %vm479 = vcmp.eq.f32.partialorder %v478, 8.507059e+37
        %v480 = vand.u32 %v468, 2147483648
        %v481 = vor.u32 1.1754944e-38, %v480
        %v482 = vsel %vm479, %v481, %v477
        %v483 = vmul.f32 %v458, %v482
        %v484 = vmin.f32 %v483, 1.0
        %v485 = vmax.f32 %v484, -1.0
        %v486 = vadd.f32 %v445, 1.0
        %v487 = vadd.f32 %v485, 1.0
        %v488 = vmul.f32 %v402, %v486
        %v489 = vmul.f32 %v403, %v487
        %v490 = vpack.c.bf16 %v489, %v488
        %v492 = vperm.slane %v325, 0
        %v510 = vunpack.c.l.b16 %v308
        %v511 = vunpack.c.l.b16 %v309
        %v512 = vunpack.c.l.b16 %v310
        %v513 = vunpack.c.l.b16 %v311
        %v514 = vunpack.c.l.b16 %v312
        %v515 = vunpack.c.l.b16 %v313
        %v516 = vunpack.c.l.b16 %v314
        %v517 = vunpack.c.l.b16 %v315
        %v518 = vunpack.c.l.b16 %v316
        %v519 = vunpack.c.l.b16 %v317
        %v520 = vunpack.c.l.b16 %v318
        %v521 = vunpack.c.l.b16 %v319
        %v522 = vunpack.c.l.b16 %v320
        %v523 = vunpack.c.l.b16 %v321
        %v524 = vunpack.c.l.b16 %v322
        %v525 = vunpack.c.l.b16 %v323
        %v526 = vpack.c.b16 %v511, %v510
        %v527 = vpack.c.b16 %v513, %v512
        %v528 = vpack.c.b16 %v515, %v514
        %v529 = vpack.c.b16 %v517, %v516
        %v530 = vpack.c.b16 %v519, %v518
        %v531 = vpack.c.b16 %v521, %v520
        %v532 = vpack.c.b16 %v523, %v522
        %v533 = vpack.c.b16 %v525, %v524
        %542 = vmatpush.bf16.msra.mxu0 %v533
        %543 = vmatpush.bf16.msra.mxu0 %v532
        %544 = vmatpush.bf16.msra.mxu0 %v531
        %545 = vmatpush.bf16.msra.mxu0 %v530
        %546 = vmatpush.bf16.msra.mxu0 %v529
        %547 = vmatpush.bf16.msra.mxu0 %v528
        %548 = vmatpush.bf16.msra.mxu0 %v527
        %549 = vmatpush.bf16.msra.mxu0 %v526
        %550 = vmatmul.bf16.gmra.mxu0 %v490
        %v551 = vpop.f32.mrf.mxu0
        %v552 = vadd.f32 %v492, %v551
        %v553 = vpop.f32.mrf.mxu0
        %v554 = vadd.f32 %v492, %v553
        %555 = vdwg.mxu0
        %v556 = vxor.u32 %v552, 2147483648
        %v557 = vxor.u32 %v554, 2147483648
        %v558 = vmul.f32 %v556, 1.442695
        %v559 = vpow.pop %v558
        %v560 = vmul.f32 %v557, 1.442695
        %v561 = vpow.pop %v560
        %v562 = vadd.f32 %v559, 1.0
        %v563 = vadd.f32 %v561, 1.0
        %v564 = vrcp.pop %v562
        %v565 = vmul.f32 %v562, %v564
        %v566 = vsub.f32 1.0, %v565
        %v567 = vmul.f32 %v564, %v566
        %v568 = vadd.f32 %v564, %v567
        %vm569 = vweird.f32 %v562
        %vm570 = vweird.f32 %v564
        %vm571 = vmor %vm569, %vm570
        %v572 = vsel %vm571, %v564, %v568
        %v573 = vand.u32 2147483647, %v562
        %vm574 = vcmp.eq.f32.partialorder %v573, 8.507059e+37
        %v575 = vand.u32 %v562, 2147483648
        %v576 = vor.u32 1.1754944e-38, %v575
        %v577 = vsel %vm574, %v576, %v572
        %v578 = vmul.f32 1.0, %v577
        %v579 = vrcp.pop %v563
        %v580 = vmul.f32 %v563, %v579
        %v581 = vsub.f32 1.0, %v580
        %v582 = vmul.f32 %v579, %v581
        %v583 = vadd.f32 %v579, %v582
        %vm584 = vweird.f32 %v563
        %vm585 = vweird.f32 %v579
        %vm586 = vmor %vm584, %vm585
        %v587 = vsel %vm586, %v579, %v583
        %v588 = vand.u32 2147483647, %v563
        %vm589 = vcmp.eq.f32.partialorder %v588, 8.507059e+37
        %v590 = vand.u32 %v563, 2147483648
        %v591 = vor.u32 1.1754944e-38, %v590
        %v592 = vsel %vm589, %v591, %v587
        %v593 = vmul.f32 1.0, %v592
        %v594 = vsub.f32 %v488, %v334
        %v595 = vsub.f32 %v489, %v335
        %v596 = vmul.f32 %v578, %v594
        %v597 = vmul.f32 %v593, %v595
        %v598 = vadd.f32 %v334, %v596
        %v599 = vadd.f32 %v335, %v597
        %600 = vst [vmem:[#allocation10] sm:$0xff] %v598
        %601 = vst [vmem:[#allocation10 + $0x8] sm:$0xff] %v599
        // Predicated region
        $region61: #{tpu_custom_call.1} parent=39 // pred_check
          %p602 = pneg %p160
        $region62: #{tpu_custom_call.1} parent=39 // pred_check_branch
          %604 = sbr.rel (%p602) target = $region64
        $region63: #{tpu_custom_call.1} parent=39 // pred_region
          %s605 = smul.u32 2, %s24
          %607 = vsyncadd [#allocation4], 0
          %s608 = smul.addr %s605, 8
          %s609 = scalar_lea.hbm %s5, %s608
          %s610 = sshll.u32 [#allocation10], 4
          %s611 = int_to_ptr.vmem [resolvable:$true] %s610
          %s612 = sshll.u32 %s609, 4
          %s613 = int_to_ptr.hbm [resolvable:$true] %s612
          %618 = dma.vmem_to_hbm [thread:$0]  %s611, 256, %s613, [#allocation4], 128, 128, 8
        $region64: #{tpu_custom_call.1} parent=39 // pred_fallthru
          _
        // Predicated region
        $region65: #{tpu_custom_call.1} parent=39 // pred_check
          %p619 = pneg %p160
        $region66: #{tpu_custom_call.1} parent=39 // pred_check_branch
          %621 = sbr.rel (%p619) target = $region68
        $region67: #{tpu_custom_call.1} parent=39 // pred_region
          %623 = dma.done [#allocation4], 256
        $region68: #{tpu_custom_call.1} parent=39 // pred_fallthru
          _
      $region40: #{tpu_custom_call.1} parent=5 // pred_fallthru
        _
      %p624 = scmp.le.s32.totalorder 2, %s15
      // Predicated region
      $region69: #{tpu_custom_call.1} parent=5 // pred_check
        %p625 = pneg %p624
      $region70: #{tpu_custom_call.1} parent=5 // pred_check_branch
        %627 = sbr.rel (%p625) target = $region72
      $region71: #{tpu_custom_call.1} parent=5 // pred_region
        %s628 = ssub.s32 %s15, 2
      $region72: #{tpu_custom_call.1} parent=5 // pred_fallthru
        _
    $region6: #{tpu_custom_call.1} parent=1 // loop_footer
      %s19 = sadd.s32 1, %s15
    $region7: #{tpu_custom_call.1} parent=1 // loop_footer_branch
      %14 = sbr.rel target = $region3
    $region8: #{tpu_custom_call.1} parent=1 // loop_exit
      _
    %629 = vsyncpa [#allocation3], 1
    %s630 = scalar_lea.sflag [#allocation3], 1
    %631 = vsyncpa %s630, 1
    %632 = vsyncpa [#allocation6], 1
    %633 = vsyncpa [#allocation9], 1
    %634 = vsyncpa [#allocation4], 1
    %s635 = scalar_lea.sflag [#allocation4], 1
    %636 = vsyncpa %s635, 1

</llo_original>
